<compile_context>
chip_gen: v7x
topology: tpu7x:2x2x1
jax: 0.10.0
libtpu: 0.0.40
codegen_flags: <defaults>
</compile_context>

<pallas_src>
import numpy as np
import jax
import jax.numpy as jnp
from jax.experimental import pallas as pl
from jax.experimental.pallas import tpu as pltpu


# -----------------------------------------------------------------------------
# Deterministic "parameter" setup implied by __init__ (config bookkeeping only;
# the abstract model owns no nn.Parameters).  s_dim chosen lane-dense (128).
# -----------------------------------------------------------------------------
CONFIG = {
    "s_dim": 128,
    "a_dim": 4,
    "p_dim": 8,
    "label_to_class_index": {0: 0, 1: 1, 2: 2, 3: 3},
    "class_index_to_label": {0: 0, 1: 1, 2: 2, 3: 3},
    "critical_classes": [0],
    "critical_class_mask": [1, 0, 0, 0],
    "loss_type": "ce",
}

# Bytes-based dispatch thresholds (per review: gate on bytes, not rows).
_WHOLE_ARRAY_BYTES = 2 << 20     # <= 2 MiB per buffer -> no-grid whole-array path
_TARGET_BLOCK_BYTES = 2 << 20    # ~2 MiB blocks for the tiled path
_MAX_LANE = 4096                 # widest lane dim tried for the slab reshape


# -----------------------------------------------------------------------------
# Pallas kernels (debug/demo path only — the abstract forward has no compute).
# -----------------------------------------------------------------------------
def _copy_kernel(x_ref, o_ref):
    o_ref[...] = x_ref[...]


def _identity_whole(slab: jax.Array) -> jax.Array:
    """No-grid whole-array identity; both buffers live fully in VMEM."""
    return pl.pallas_call(
        _copy_kernel,
        out_shape=jax.ShapeDtypeStruct(slab.shape, slab.dtype),
        in_specs=[pl.BlockSpec(memory_space=pltpu.MemorySpace.VMEM)],
        out_specs=pl.BlockSpec(memory_space=pltpu.MemorySpace.VMEM),
    )(slab)


def _identity_tiled(slab: jax.Array, tb: int) -> jax.Array:
    """Row-tiled identity over a lane-dense (rows, lane) slab.

    tb rows per tile (multiple of 8), lane a multiple of 128 -> full unmasked
    vst stores.  Block bytes ~2 MiB; double-buffered in+out stays ~8 MiB VMEM,
    well under every generation's default scoped limit (no vmem raise needed).
    """
    rows, lane = slab.shape
    grid = (rows // tb,)
    return pl.pallas_call(
        _copy_kernel,
        out_shape=jax.ShapeDtypeStruct((rows, lane), slab.dtype),
        grid=grid,
        in_specs=[pl.BlockSpec((tb, lane), lambda i: (i, 0))],
        out_specs=pl.BlockSpec((tb, lane), lambda i: (i, 0)),
        compiler_params=pltpu.CompilerParams(
            # Lets v7x's two TensorCores split the grid; measured no-op on
            # single-core v5e/v6e (kept only for v7x).
            dimension_semantics=("parallel",),
        ),
    )(slab)


def pallas_identity(x: jax.Array) -> jax.Array:
    """Debug identity through a Pallas copy kernel.

    Wrapper-side layout plumbing only: flatten x, pad to a wide lane-dense
    (rows, lane) slab, copy through VMEM, slice/reshape back.  Dispatch is
    bytes-gated: small arrays take the no-grid whole-array path, large ones
    take the ~2 MiB-block row-tiled path.
    """
    if x.size == 0:
        return x

    n = int(x.size)
    itemsize = jnp.dtype(x.dtype).itemsize
    total_bytes = n * itemsize

    # Widest lane dim that still gives at least 8 rows (one full sublane tile).
    lane = _MAX_LANE
    while lane > 128 and pl.cdiv(n, lane) < 8:
        lane //= 2

    flat = x.reshape(-1)

    if total_bytes <= _WHOLE_ARRAY_BYTES:
        rows = pl.cdiv(n, lane)
        padded = rows * lane
        if padded != n:
            flat = jnp.pad(flat, (0, padded - n))
        out_flat = _identity_whole(flat.reshape(rows, lane)).reshape(-1)
    else:
        row_bytes = lane * itemsize
        # ~2 MiB blocks; rows per tile always a multiple of 8 (never collapses
        # to tiny tiles like the old divisor search could).
        tb = max(8, ((_TARGET_BLOCK_BYTES // row_bytes) // 8) * 8)
        rows = pl.cdiv(n, lane)
        rows_pad = pl.cdiv(rows, tb) * tb
        padded = rows_pad * lane
        if padded != n:
            flat = jnp.pad(flat, (0, padded - n))
        out_flat = _identity_tiled(flat.reshape(rows_pad, lane), tb).reshape(-1)

    if out_flat.shape[0] != n:
        out_flat = out_flat[:n]
    return out_flat.reshape(x.shape)


# -----------------------------------------------------------------------------
# JAX/Pallas mirror of AbstractModel.
# -----------------------------------------------------------------------------
class AbstractModelPallas:
    """Mirror of AbstractModel (abstract base; forward is a no-op)."""

    def __init__(self, config: dict):
        self.s_dim = config["s_dim"]
        self.a_dim = config["a_dim"]
        self.p_dim = config["p_dim"]
        self.label_to_class_index = config["label_to_class_index"]
        self.class_index_to_label = config["class_index_to_label"]
        self.critical_classes = config["critical_classes"]
        self.critical_class_mask = np.array(config["critical_class_mask"]).astype(bool)
        self.loss_type = config["loss_type"]
        # TODO(synk): loss_criterion / u_func are injected abstract classes with no
        # concrete compute in this module; nothing to lower.

    def forward(self, x, pref):
        # Exact PyTorch semantics: torch.tensor([]) -> empty float32, shape (0,).
        # The reference forward ignores x and pref entirely -> ZERO device work.
        del x, pref
        return jnp.zeros((0,), dtype=jnp.float32)

    __call__ = forward

    # Debug-only hook exercising the Pallas path (not part of forward).
    def debug_identity(self, x):
        return pallas_identity(x)

    def choose_action(self, state, pref):
        # TODO(synk): abstract in the reference; no concrete compute to lower.
        return (None, None)

    def make_step(self, states, labels, preds, prefs):
        # TODO(synk): abstract in the reference; no concrete compute to lower.
        return (None, None, None)

    def loss_func(self, *args, **kwargs):
        pass


if __name__ == "__main__":
    key = jax.random.PRNGKey(0)
    kx, kp, kr, kb = jax.random.split(key, 4)

    model = AbstractModelPallas(CONFIG)

    # Small inputs consistent with forward(x, pref): x (B, s_dim), pref (B, p_dim).
    B = 8
    x = jax.random.normal(kx, (B, CONFIG["s_dim"]), dtype=jnp.float32)
    pref = jax.random.uniform(kp, (B, CONFIG["p_dim"]), dtype=jnp.float32)

    # 1) Forward semantics: matches torch.tensor([]) — empty float32, shape (0,).
    out = jax.block_until_ready(model(x, pref))
    assert out.shape == (0,) and out.dtype == jnp.float32

    # 2) Small lane-dense input -> whole-array (no-grid) path.
    y = jax.block_until_ready(model.debug_identity(x))
    np.testing.assert_array_equal(np.asarray(y), np.asarray(x))

    # 3) Ragged small input (not lane/sublane aligned) -> wrapper pads, whole-array path.
    xr = jax.random.normal(kr, (100, 7), dtype=jnp.float32)
    yr = jax.block_until_ready(pallas_identity(xr))
    np.testing.assert_array_equal(np.asarray(yr), np.asarray(xr))

    # 4) Larger input -> reshaped to a (256, 4096) slab, ~2 MiB blocks, grid=(2,),
    #    "parallel" batch axis so v7x's two TCs split the copy.
    xb = jax.random.normal(kb, (8192, CONFIG["s_dim"]), dtype=jnp.float32)
    yb = jax.block_until_ready(pallas_identity(xb))
    np.testing.assert_array_equal(np.asarray(yb), np.asarray(xb))

    print("KERNEL_OK")
</pallas_src>

<mosaic_0001>
module attributes {stable_mosaic.version = 11 : i64} {
  func.func @_copy_kernel(%arg0: memref<8x128xf32, #tpu.memory_space<vmem>>, %arg1: memref<8x128xf32, #tpu.memory_space<vmem>>) attributes {dimension_semantics = [], scalar_prefetch = 0 : i64, scratch_operands = 0 : i64, tpu.core_type = #tpu.core_type<tc>} {
    %c0 = arith.constant 0 : index
    %c0_0 = arith.constant 0 : index
    %0 = vector.load %arg0[%c0, %c0_0] : memref<8x128xf32, #tpu.memory_space<vmem>>, vector<8x128xf32>
    %c0_1 = arith.constant 0 : index
    %c0_2 = arith.constant 0 : index
    %1 = vector.load %arg1[%c0_1, %c0_2] : memref<8x128xf32, #tpu.memory_space<vmem>>, vector<8x128xf32>
    tpu.vector_store %arg1[%c0_1, %c0_2], %0 {strides = array<i32>} : memref<8x128xf32, #tpu.memory_space<vmem>>, vector<8x128xf32>,
    return
  }
}

</mosaic_0001>

<llo_original>
// kernel: tpu_custom_call.1
$region0: #{tpu_custom_call.1}
  #allocation0 [shape = 'u32[]', space=smem, size = 0x4, offset = 0x4, fixed_abs, tag = 'smem constant byte address 0x4 - core index']
  #allocation1 [shape = 'u32[144,128]{1,0:T(1,128)}', space=vmem, size = 0x12000, scoped, tag = 'internal scratch']
  %s0 = inlined_call_operand.hbm [shape: f32[8,128], index: 0, kind: input, shape index: {}]
  %s1 = inlined_call_operand.hbm [shape: f32[8,128], index: 1, kind: output, shape index: {}]
  %s2 = sld [smem:[#allocation0]]
  $region18: #{tpu_custom_call.1} parent=0
    _
  %s4 = ssub.s32 1, %s2
  %s5 = scalar_select 0, %s4, %s2
  $region1: #{tpu_custom_call.1} parent=0
    #allocation2 [shape = 'u8[4096]{0}', space=vmem, size = 0x1000, scoped, tag = 'input window, operand 0, single buffered']
    #allocation3 [shape = 's32[1]{0}', space=sflag, size = 0x4, scoped, tag = 'scoped memory for tpu_custom_call.1']
    #allocation4 [shape = 's32[1]{0}', space=sflag, size = 0x4, scoped, tag = 'scoped memory for tpu_custom_call.1']
    #allocation5 [shape = 'u8[4096]{0}', space=vmem, size = 0x1000, scoped, tag = 'output window, operand 0, single buffered']
    %6 = vsyncpa [#allocation3], 0
    %7 = vsyncpa [#allocation4], 0
    // Predicated region
    $region2: #{tpu_custom_call.1} parent=1 // pred_check
      _
    $region3: #{tpu_custom_call.1} parent=1 // pred_check_branch
      %9 = sbr.rel (0) target = $region5
    $region4: #{tpu_custom_call.1} parent=1 // pred_region
      %s11 = ssub.s32 128, 128
      %12 = vsyncadd [#allocation3], %s11
      %s14 = sshll.u32 [#allocation2], 4
      %s15 = int_to_ptr.vmem [resolvable:$true] %s14
      %17 = dma.hbm_to_vmem [thread:$0]  %s0, 128, %s15, [#allocation3]
    $region5: #{tpu_custom_call.1} parent=1 // pred_fallthru
      _
    // Predicated region
    $region6: #{tpu_custom_call.1} parent=1 // pred_check
      _
    $region7: #{tpu_custom_call.1} parent=1 // pred_check_branch
      %19 = sbr.rel (0) target = $region9
    $region8: #{tpu_custom_call.1} parent=1 // pred_region
      %20 = dma.done [#allocation3], 128
    $region9: #{tpu_custom_call.1} parent=1 // pred_fallthru
      _
    %v21 = vld [vmem:[#allocation2] sm:$0xff]
    %22 = vst [vmem:[#allocation5] sm:$0xff] %v21
    // Predicated region
    $region10: #{tpu_custom_call.1} parent=1 // pred_check
      _
    $region11: #{tpu_custom_call.1} parent=1 // pred_check_branch
      %24 = sbr.rel (0) target = $region13
    $region12: #{tpu_custom_call.1} parent=1 // pred_region
      %s26 = ssub.s32 128, 128
      %27 = vsyncadd [#allocation4], %s26
      %s29 = sshll.u32 [#allocation5], 4
      %s30 = int_to_ptr.vmem [resolvable:$true] %s29
      %32 = dma.vmem_to_hbm [thread:$0]  %s30, 128, %s1, [#allocation4]
    $region13: #{tpu_custom_call.1} parent=1 // pred_fallthru
      _
    // Predicated region
    $region14: #{tpu_custom_call.1} parent=1 // pred_check
      _
    $region15: #{tpu_custom_call.1} parent=1 // pred_check_branch
      %34 = sbr.rel (0) target = $region17
    $region16: #{tpu_custom_call.1} parent=1 // pred_region
      %35 = dma.done [#allocation4], 128
    $region17: #{tpu_custom_call.1} parent=1 // pred_fallthru
      _
    %36 = vsyncpa [#allocation3], 1
    %37 = vsyncpa [#allocation4], 1

</llo_original>
